<compile_context>
chip_gen: v6e
topology: v6e:2x2x1
jax: 0.10.0
libtpu: 0.0.40
codegen_flags: <defaults>
</compile_context>

<pallas_src>
import jax
import jax.numpy as jnp
from jax.experimental import pallas as pl
from jax.experimental.pallas import tpu as pltpu


_TARGET_TILE_BYTES = 8 * 1024 * 1024      # ~8 MiB per tile
_VMEM_LIMIT_BYTES = 48 * 1024 * 1024      # 2 bufs * 2 arrays * 8 MiB + slack


def _copy_kernel(x_ref, o_ref):
    # Identity copy of the current block.
    o_ref[...] = x_ref[...]


def _sublane_multiple(itemsize: int) -> int:
    """Native sublane packing multiple for the dtype width."""
    if itemsize >= 4:
        return 8
    if itemsize == 2:
        return 16
    return 32


def _pick_lane_width(total: int, max_lanes: int = 8192) -> int:
    """Largest multiple of 128 that divides `total`, capped at max_lanes.

    Returns 0 if `total` is not a multiple of 128 (caller falls back to
    2-D (n, k) tiling).
    """
    m = (max_lanes // 128) * 128
    while m >= 128:
        if total % m == 0:
            return m
        m -= 128
    return 0


def _pick_row_tile(rows: int, lane_width: int, itemsize: int,
                   target_bytes: int = _TARGET_TILE_BYTES) -> int:
    """Row tile for the flat (rows, lane_width) layout."""
    sub = _sublane_multiple(itemsize)
    budget_rows = max(1, target_bytes // max(1, lane_width * itemsize))
    if budget_rows >= rows:
        tile_rows = rows                               # full dim -> always legal
    else:
        tile_rows = min(rows, max(sub, (budget_rows // sub) * sub))
    # Keep >= 2 grid steps when the array is big enough to split cleanly, so
    # v7x's two TensorCores both issue DMAs (neutral on single-TC v5e/v6e).
    if tile_rows == rows and rows >= 2 * sub:
        half = ((rows + 1) // 2 + sub - 1) // sub * sub
        half = max(sub, half)
        if half < rows:
            tile_rows = half
    return tile_rows


def _pick_tiles_2d(n: int, k: int, itemsize: int,
                   target_bytes: int = _TARGET_TILE_BYTES):
    """(tile_n, tile_k) for the 2-D fallback (total not a multiple of 128).

    Lane tile fills the byte budget (no hard 2048-lane cap); row tile is a
    multiple of the dtype's native sublane count.
    """
    sub = _sublane_multiple(itemsize)
    # Lane (fast) dimension: full k if `sub` rows of it fit the budget,
    # otherwise the largest multiple of 128 such that `sub` rows fill it.
    max_lane_elems = max(128, (target_bytes // (sub * itemsize) // 128) * 128)
    if k <= max_lane_elems:
        tile_k = k                                     # full dim -> always legal
    else:
        tile_k = min(max_lane_elems, (k // 128) * 128)
    # Sublane (row) dimension: fill remaining budget, multiple of `sub`.
    budget_rows = max(1, target_bytes // max(1, tile_k * itemsize))
    if budget_rows >= n:
        tile_n = n
    else:
        tile_n = min(n, max(sub, (budget_rows // sub) * sub))
    # Avoid collapsing a large array into a single grid step (v7x megacore).
    if tile_n == n and tile_k == k and n >= 2 * sub:
        half = ((n + 1) // 2 + sub - 1) // sub * sub
        half = max(sub, half)
        if half < n:
            tile_n = half
    return tile_n, tile_k


def flatten_layer(x: jax.Array) -> jax.Array:
    """Pallas equivalent of FlattenLayer.forward: x.view(x.shape[0], -1)."""
    n = x.shape[0]
    k = 1
    for d in x.shape[1:]:
        k *= d
    total = n * k
    itemsize = jnp.dtype(x.dtype).itemsize

    lane = _pick_lane_width(total)
    if lane > 0:
        # Preferred path: tile over the flat element count.  Lane width is a
        # multiple of 128 that divides the total, so every store is lane-dense
        # and the tile shape is independent of the batch size.
        rows = total // lane
        tile_rows = _pick_row_tile(rows, lane, itemsize)
        grid = (pl.cdiv(rows, tile_rows),)
        x2d = x.reshape(rows, lane)          # zero-copy metadata reshape
        out_flat = pl.pallas_call(
            _copy_kernel,
            out_shape=jax.ShapeDtypeStruct((rows, lane), x.dtype),
            grid_spec=pltpu.PrefetchScalarGridSpec(
                num_scalar_prefetch=0,
                grid=grid,
                in_specs=[pl.BlockSpec((tile_rows, lane), lambda i: (i, 0))],
                out_specs=pl.BlockSpec((tile_rows, lane), lambda i: (i, 0)),
            ),
            compiler_params=pltpu.CompilerParams(
                dimension_semantics=("parallel",),
                vmem_limit_bytes=_VMEM_LIMIT_BYTES,
            ),
            cost_estimate=pl.CostEstimate(
                flops=0,
                transcendentals=0,
                bytes_accessed=2 * total * itemsize,
            ),
        )(x2d)
        return out_flat.reshape(n, k)        # zero-copy metadata reshape

    # Fallback: total not a multiple of 128 -> tile the (n, k) view directly.
    tile_n, tile_k = _pick_tiles_2d(n, k, itemsize)
    grid = (pl.cdiv(n, tile_n), pl.cdiv(k, tile_k))
    x2d = x.reshape(n, k)
    out = pl.pallas_call(
        _copy_kernel,
        out_shape=jax.ShapeDtypeStruct((n, k), x.dtype),
        grid_spec=pltpu.PrefetchScalarGridSpec(
            num_scalar_prefetch=0,
            grid=grid,
            in_specs=[pl.BlockSpec((tile_n, tile_k), lambda i, j: (i, j))],
            out_specs=pl.BlockSpec((tile_n, tile_k), lambda i, j: (i, j)),
        ),
        compiler_params=pltpu.CompilerParams(
            dimension_semantics=("parallel", "parallel"),
            vmem_limit_bytes=_VMEM_LIMIT_BYTES,
        ),
        cost_estimate=pl.CostEstimate(
            flops=0,
            transcendentals=0,
            bytes_accessed=2 * total * itemsize,
        ),
    )(x2d)
    return out


if __name__ == "__main__":
    key = jax.random.PRNGKey(0)
    # NCHW input, small shapes: batch=2, channels=4, spatial=16x16.
    x = jax.random.normal(key, (2, 4, 16, 16), dtype=jnp.float32)

    y = flatten_layer(x)
    jax.block_until_ready(y)

    # Reference: plain reshape (what torch .view(N, -1) does).
    y_ref = x.reshape(x.shape[0], -1)
    assert y.shape == (2, 4 * 16 * 16), y.shape
    assert y.dtype == x.dtype
    assert jnp.array_equal(y, y_ref)

    # Also exercise the 2-D fallback path (flat size not a multiple of 128).
    x_odd = jax.random.normal(key, (2, 3, 5, 5), dtype=jnp.float32)
    y_odd = flatten_layer(x_odd)
    jax.block_until_ready(y_odd)
    assert jnp.array_equal(y_odd, x_odd.reshape(x_odd.shape[0], -1))

    print("KERNEL_OK")
</pallas_src>

<mosaic_0001>
module attributes {stable_mosaic.version = 11 : i64} {
  func.func @_copy_kernel(%arg0: i32, %arg1: memref<1x2048xf32, #tpu.memory_space<vmem>>, %arg2: memref<1x2048xf32, #tpu.memory_space<vmem>>) attributes {dimension_semantics = [#tpu.dimension_semantics<parallel>], iteration_bounds = array<i64: 1>, scalar_prefetch = 0 : i64, scratch_operands = 0 : i64, tpu.core_type = #tpu.core_type<tc>, window_params = [{transform_indices = @transform_0, window_bounds = array<i64: 1, 2048>}, {transform_indices = @transform_1, window_bounds = array<i64: 1, 2048>}]} {
    %c0 = arith.constant 0 : index
    %c0_0 = arith.constant 0 : index
    %0 = vector.load %arg1[%c0, %c0_0] : memref<1x2048xf32, #tpu.memory_space<vmem>>, vector<1x2048xf32>
    %c0_1 = arith.constant 0 : index
    %c0_2 = arith.constant 0 : index
    %1 = vector.load %arg2[%c0_1, %c0_2] : memref<1x2048xf32, #tpu.memory_space<vmem>>, vector<1x2048xf32>
    tpu.vector_store %arg2[%c0_1, %c0_2], %0 {strides = array<i32>} : memref<1x2048xf32, #tpu.memory_space<vmem>>, vector<1x2048xf32>,
    return
  }
  func.func @transform_0(%arg0: i32) -> (i32, i32) {
    %c0_i32 = arith.constant 0 : i32
    %c0_i32_0 = arith.constant 0 : i32
    return %arg0, %c0_i32 : i32, i32
  }
  func.func @transform_1(%arg0: i32) -> (i32, i32) {
    %c0_i32 = arith.constant 0 : i32
    %c0_i32_0 = arith.constant 0 : i32
    return %arg0, %c0_i32 : i32, i32
  }
}

</mosaic_0001>

<llo_original>
// kernel: tpu_custom_call.1
$region0: #{tpu_custom_call.1}
  #allocation0 [shape = 'u32[]', space=smem, size = 0x4, offset = 0x4, fixed_abs, tag = 'smem constant byte address 0x4 - core index']
  #allocation1 [shape = 'u32[144,128]{1,0:T(1,128)}', space=vmem, size = 0x12000, scoped, tag = 'internal scratch']
  %s0 = inlined_call_operand.hbm [shape: f32[1,2048], index: 0, kind: input, shape index: {}]
  %s1 = inlined_call_operand.hbm [shape: f32[1,2048], index: 1, kind: output, shape index: {}]
  %s2 = sld [smem:[#allocation0]]
  $region18: #{tpu_custom_call.1} parent=0
    _
  %s4 = ssub.s32 1, %s2
  %s5 = scalar_select 0, %s4, %s2
  $region1: #{tpu_custom_call.1} parent=0
    #allocation2 [shape = 'u8[8192]{0}', space=vmem, size = 0x2000, scoped, tag = 'input window, operand 0, single buffered']
    #allocation3 [shape = 's32[1]{0}', space=sflag, size = 0x4, scoped, tag = 'scoped memory for tpu_custom_call.1']
    #allocation4 [shape = 's32[1]{0}', space=sflag, size = 0x4, scoped, tag = 'scoped memory for tpu_custom_call.1']
    #allocation5 [shape = 'u8[8192]{0}', space=vmem, size = 0x2000, scoped, tag = 'output window, operand 0, single buffered']
    %6 = vsyncpa [#allocation3], 0
    %7 = vsyncpa [#allocation4], 0
    // Predicated region
    $region2: #{tpu_custom_call.1} parent=1 // pred_check
      _
    $region3: #{tpu_custom_call.1} parent=1 // pred_check_branch
      %9 = sbr.rel (0) target = $region5
    $region4: #{tpu_custom_call.1} parent=1 // pred_region
      %s11 = ssub.s32 256, 256
      %12 = vsyncadd [#allocation3], %s11
      %s14 = sshll.u32 [#allocation2], 4
      %s15 = int_to_ptr.vmem [resolvable:$true] %s14
      %17 = dma.hbm_to_vmem [thread:$0]  %s0, 256, %s15, [#allocation3]
    $region5: #{tpu_custom_call.1} parent=1 // pred_fallthru
      _
    // Predicated region
    $region6: #{tpu_custom_call.1} parent=1 // pred_check
      _
    $region7: #{tpu_custom_call.1} parent=1 // pred_check_branch
      %19 = sbr.rel (0) target = $region9
    $region8: #{tpu_custom_call.1} parent=1 // pred_region
      %20 = dma.done [#allocation3], 256
    $region9: #{tpu_custom_call.1} parent=1 // pred_fallthru
      _
    %v21 = vld [vmem:[#allocation2] sm:$0xff]
    %v22 = vld [vmem:[#allocation2 + $0x8] sm:$0xff]
    %23 = vst [vmem:[#allocation5] sm:$0xff] %v21
    %24 = vst [vmem:[#allocation5 + $0x8] sm:$0xff] %v22
    // Predicated region
    $region10: #{tpu_custom_call.1} parent=1 // pred_check
      _
    $region11: #{tpu_custom_call.1} parent=1 // pred_check_branch
      %26 = sbr.rel (0) target = $region13
    $region12: #{tpu_custom_call.1} parent=1 // pred_region
      %s28 = ssub.s32 256, 256
      %29 = vsyncadd [#allocation4], %s28
      %s31 = sshll.u32 [#allocation5], 4
      %s32 = int_to_ptr.vmem [resolvable:$true] %s31
      %34 = dma.vmem_to_hbm [thread:$0]  %s32, 256, %s1, [#allocation4]
    $region13: #{tpu_custom_call.1} parent=1 // pred_fallthru
      _
    // Predicated region
    $region14: #{tpu_custom_call.1} parent=1 // pred_check
      _
    $region15: #{tpu_custom_call.1} parent=1 // pred_check_branch
      %36 = sbr.rel (0) target = $region17
    $region16: #{tpu_custom_call.1} parent=1 // pred_region
      %37 = dma.done [#allocation4], 256
    $region17: #{tpu_custom_call.1} parent=1 // pred_fallthru
      _
    %38 = vsyncpa [#allocation3], 1
    %39 = vsyncpa [#allocation4], 1

</llo_original>
